<compile_context>
chip_gen: v6e
topology: v6e:2x2x1
jax: 0.10.0
libtpu: 0.0.40
codegen_flags: <defaults>
</compile_context>

<pallas_src>
import functools

import jax
import jax.numpy as jnp
from jax.experimental import pallas as pl
from jax.experimental.pallas import tpu as pltpu

ALPHA0 = 1.0   # self.alpha[0]
ALPHA1 = 10.0  # self.alpha[1]
# note: self.gamma = 2 is defined but never used in the PyTorch forward.


def _vmem_capacity_bytes():
    try:
        return int(pltpu.get_tpu_info().vmem_capacity_bytes)
    except Exception:
        return 64 << 20  # conservative fallback: v7x per-TensorCore VMEM


_S_TILE_CANDIDATES = (512, 384, 256, 192, 128, 96, 64, 48, 32, 16, 8)


def _pick_tiles(B, S, H, itemsize, vmem_cap):
    """Largest (B_TILE, S_TILE) with an x block <= ~30% of VMEM (2x buffered -> ~60%)."""
    B_TILE = B if B <= 8 else 8
    block_budget = int(0.30 * vmem_cap)
    row_bytes = B_TILE * H * itemsize
    s_cap = 8
    for cand in _S_TILE_CANDIDATES:
        if cand * row_bytes <= block_budget:
            s_cap = cand
            break
    if S <= s_cap:
        return B_TILE, S           # single full-S tile (ok per (8,128) rule: equals dim)
    return B_TILE, s_cap           # multiple of 8


def _pooled_partial_kernel(x_ref, w_ref, part_ref, acc_ref, *,
                           S, S_TILE, n_s_tiles, s_tiles_per_split):
    """Per (split, B-tile): accumulate sum_s x[b,s,:] over this split's S tiles in f32,
    then emit the un-normalized partial dot  sum_s x[b,s,:]·w  at the last S step."""
    sp = pl.program_id(0)
    s_idx = pl.program_id(2)

    @pl.when(s_idx == 0)
    def _init():
        acc_ref[...] = jnp.zeros_like(acc_ref)

    x = x_ref[...].astype(jnp.float32)               # (B_TILE, S_TILE, H)

    if S % S_TILE != 0:
        # Ragged S: mask only on the LAST global tile; unmasked sum elsewhere.
        gtile = sp * s_tiles_per_split + s_idx
        is_last_global = gtile == (n_s_tiles - 1)

        @pl.when(is_last_global)
        def _masked():
            rem = S - (n_s_tiles - 1) * S_TILE        # static, in (0, S_TILE)
            row = jax.lax.broadcasted_iota(jnp.int32, (1, S_TILE, 1), 1)
            acc_ref[...] += jnp.sum(jnp.where(row < rem, x, 0.0), axis=1)

        @pl.when(jnp.logical_not(is_last_global))
        def _unmasked():
            acc_ref[...] += jnp.sum(x, axis=1)
    else:
        acc_ref[...] += jnp.sum(x, axis=1)            # sublane reduce -> (B_TILE, H)

    @pl.when(s_idx == pl.num_programs(2) - 1)
    def _finalize():
        w = w_ref[...].astype(jnp.float32)                           # (1, H)
        # Linear(4096, 1): elementwise mul + lane reduce (VPU/XLU, no N=1 MXU matmul).
        part = jnp.sum(acc_ref[...] * w, axis=-1, keepdims=True)     # (B_TILE, 1)
        part_ref[...] = part[None, :, :].astype(part_ref.dtype)


def classifier_head(x, w, b, labels=None, *, s_tile=None):
    """x: [B,S,H] f32/bf16, w: [1,H], b: [1,1], labels: [B] (0/1 ints) or None."""
    B, S, H = x.shape
    itemsize = jnp.dtype(x.dtype).itemsize
    vmem_cap = _vmem_capacity_bytes()

    B_TILE, S_TILE = _pick_tiles(B, S, H, itemsize, vmem_cap)
    if s_tile is not None:                            # test/override hook
        assert s_tile == S or s_tile % 8 == 0
        S_TILE = min(s_tile, S)

    n_b_tiles = pl.cdiv(B, B_TILE)
    n_s_tiles = pl.cdiv(S, S_TILE)

    # v7x: if a single B tile would idle the second TensorCore, split the S
    # reduction across a leading parallel axis (only when it divides cleanly).
    num_splits = 2 if (n_b_tiles == 1 and n_s_tiles >= 2 and n_s_tiles % 2 == 0) else 1
    s_tiles_per_split = n_s_tiles // num_splits

    grid = (num_splits, n_b_tiles, s_tiles_per_split)

    kernel = functools.partial(
        _pooled_partial_kernel, S=S, S_TILE=S_TILE,
        n_s_tiles=n_s_tiles, s_tiles_per_split=s_tiles_per_split)

    # Explicit VMEM limit: 2x-buffered x blocks + w + accumulator + slack,
    # capped below physical per-core capacity.
    x_block_bytes = B_TILE * S_TILE * H * itemsize
    vmem_limit = 2 * x_block_bytes + B_TILE * H * 4 + 2 * H * 4 + (8 << 20)
    vmem_limit = max(16 << 20, min(vmem_limit, int(0.9 * vmem_cap)))

    cost = pl.CostEstimate(
        flops=2 * B * S * H + 2 * B * H,
        transcendentals=0,
        bytes_accessed=B * S * H * itemsize
                       + H * jnp.dtype(w.dtype).itemsize
                       + num_splits * B * 4,
    )

    partials = pl.pallas_call(
        kernel,
        out_shape=jax.ShapeDtypeStruct((num_splits, B, 1), jnp.float32),
        grid_spec=pltpu.PrefetchScalarGridSpec(
            num_scalar_prefetch=0,
            grid=grid,
            in_specs=[
                # Streamed hidden states: double-buffered tiles over (split, B, S).
                pl.BlockSpec(
                    (B_TILE, S_TILE, H),
                    lambda sp, bi, si, _n=s_tiles_per_split: (bi, sp * _n + si, 0)),
                # Classifier weight: constant index map -> resident, DMA'd once.
                pl.BlockSpec((1, H), lambda sp, bi, si: (0, 0)),
            ],
            out_specs=pl.BlockSpec((1, B_TILE, 1), lambda sp, bi, si: (sp, bi, 0)),
            scratch_shapes=[pltpu.VMEM((B_TILE, H), jnp.float32)],
        ),
        compiler_params=pltpu.CompilerParams(
            dimension_semantics=("parallel", "parallel", "arbitrary"),
            vmem_limit_bytes=vmem_limit,
        ),
        cost_estimate=cost,
    )(x, w)

    # Tiny epilogue on a (num_splits, B, 1) array: combine split partial dots,
    # normalize by S (mean pool), add bias.
    logits = (partials.sum(axis=0) * (1.0 / S) + b[0, 0]).astype(jnp.float32)

    if labels is None:
        return logits, None

    # Matches PyTorch:
    #   loss = BCEWithLogitsLoss()(logits.view(-1), y)     # scalar (mean)
    #   loss = (alpha * loss).mean()                        # == mean(alpha) * mean_bce
    # (alpha does NOT weight per-example losses in the original code; reproduced faithfully.)
    z = logits.reshape(-1)
    y = labels.reshape(-1).astype(jnp.float32)
    per = jnp.maximum(z, 0.0) - z * y + jnp.log1p(jnp.exp(-jnp.abs(z)))
    mean_bce = jnp.mean(per)
    alpha = ALPHA0 * (1.0 - y) + ALPHA1 * y
    loss = jnp.mean(alpha * mean_bce)
    return logits, loss


def _reference(x, w, b, labels):
    pooled = jnp.mean(x.astype(jnp.float32), axis=1)
    logits = pooled @ w.T.astype(jnp.float32) + b[0, 0]
    z = logits.reshape(-1)
    y = labels.astype(jnp.float32).reshape(-1)
    per = jnp.maximum(z, 0.0) - z * y + jnp.log1p(jnp.exp(-jnp.abs(z)))
    mean_bce = jnp.mean(per)
    alpha = ALPHA0 * (1.0 - y) + ALPHA1 * y
    loss = jnp.mean(alpha * mean_bce)
    return logits, loss


if __name__ == "__main__":
    H = 4096   # fixed by nn.Linear(4096, 1)

    key = jax.random.PRNGKey(0)
    kx, kw, kb, k2, k3 = jax.random.split(key, 5)

    w = jax.random.normal(kw, (1, H), dtype=jnp.float32) * 0.02
    b = jax.random.normal(kb, (1, 1), dtype=jnp.float32) * 0.02
    labels = jnp.array([0, 1], dtype=jnp.int32)

    def check(xx, tag, s_tile=None):
        logits, loss = classifier_head(xx, w, b, labels, s_tile=s_tile)
        logits = jax.block_until_ready(logits)
        loss = jax.block_until_ready(loss)
        ref_logits, ref_loss = _reference(xx, w, b, labels)
        assert jnp.allclose(logits.reshape(-1), ref_logits.reshape(-1),
                            atol=2e-3, rtol=2e-3), (tag, logits, ref_logits)
        assert jnp.allclose(loss, ref_loss, atol=2e-3, rtol=2e-3), (tag, loss, ref_loss)

    # Main path: bf16 hidden states (kernel is HBM-bound; the backbone should
    # emit bf16 last_hidden_state — do not cast in the wrapper).
    B, S = 2, 8
    x = jax.random.normal(kx, (B, S, H), dtype=jnp.float32).astype(jnp.bfloat16)
    check(x, "bf16 single-tile")

    # Exercise the multi-S-tile + split ("parallel" leading axis) path.
    x2 = jax.random.normal(k2, (2, 64, H), dtype=jnp.float32)
    check(x2, "f32 multi-tile split", s_tile=16)

    # Exercise ragged S (mask only on the last global tile) with bf16.
    x3 = jax.random.normal(k3, (2, 60, H), dtype=jnp.float32).astype(jnp.bfloat16)
    check(x3, "bf16 ragged split", s_tile=16)

    print("KERNEL_OK")
</pallas_src>

<mosaic_0001>
module attributes {stable_mosaic.version = 11 : i64} {
  func.func @_pooled_partial_kernel(%arg0: i32, %arg1: i32, %arg2: i32, %arg3: memref<2x8x4096xbf16, #tpu.memory_space<vmem>>, %arg4: memref<1x4096xf32, #tpu.memory_space<vmem>>, %arg5: memref<1x2x1xf32, #tpu.memory_space<vmem>>, %arg6: memref<2x4096xf32, #tpu.memory_space<vmem>>) attributes {dimension_semantics = [#tpu.dimension_semantics<parallel>, #tpu.dimension_semantics<parallel>, #tpu.dimension_semantics<arbitrary>], iteration_bounds = array<i64: 1, 1, 1>, scalar_prefetch = 0 : i64, scratch_operands = 1 : i64, tpu.core_type = #tpu.core_type<tc>, window_params = [{transform_indices = @transform_0, window_bounds = array<i64: 2, 8, 4096>}, {pipeline_mode = #tpu.pipeline_mode<synchronous>, transform_indices = @transform_1, window_bounds = array<i64: 1, 4096>}, {transform_indices = @transform_2, window_bounds = array<i64: 1, 2, 1>}]} {
    %c0_i32 = arith.constant 0 : i32
    %0 = arith.cmpi eq, %arg2, %c0_i32 : i32
    %1 = arith.extui %0 : i1 to i32
    %c0_i32_0 = arith.constant 0 : i32
    %2 = arith.cmpi ne, %1, %c0_i32_0 : i32
    scf.if %2 {
      %cst_9 = arith.constant 0.000000e+00 : f32
      %12 = vector.broadcast %cst_9 : f32 to vector<2x4096xf32>
      %c0_10 = arith.constant 0 : index
      %c0_11 = arith.constant 0 : index
      %13 = vector.load %arg6[%c0_10, %c0_11] : memref<2x4096xf32, #tpu.memory_space<vmem>>, vector<2x4096xf32>
      tpu.vector_store %arg6[%c0_10, %c0_11], %12 {strides = array<i32>} : memref<2x4096xf32, #tpu.memory_space<vmem>>, vector<2x4096xf32>,
    } else {
    }
    %c0 = arith.constant 0 : index
    %c0_1 = arith.constant 0 : index
    %c0_2 = arith.constant 0 : index
    %3 = vector.load %arg3[%c0, %c0_1, %c0_2] : memref<2x8x4096xbf16, #tpu.memory_space<vmem>>, vector<2x8x4096xbf16>
    %4 = arith.extf %3 : vector<2x8x4096xbf16> to vector<2x8x4096xf32>
    %c0_3 = arith.constant 0 : index
    %c0_4 = arith.constant 0 : index
    %5 = vector.load %arg6[%c0_3, %c0_4] : memref<2x4096xf32, #tpu.memory_space<vmem>>, vector<2x4096xf32>
    %cst = arith.constant dense<0.000000e+00> : vector<2x4096xf32>
    %6 = vector.multi_reduction <add>, %4, %cst [1] : vector<2x8x4096xf32> to vector<2x4096xf32>
    %7 = arith.addf %5, %6 : vector<2x4096xf32>
    %c0_5 = arith.constant 0 : index
    %c0_6 = arith.constant 0 : index
    %8 = vector.load %arg6[%c0_5, %c0_6] : memref<2x4096xf32, #tpu.memory_space<vmem>>, vector<2x4096xf32>
    tpu.vector_store %arg6[%c0_5, %c0_6], %7 {strides = array<i32>} : memref<2x4096xf32, #tpu.memory_space<vmem>>, vector<2x4096xf32>,
    %c0_i32_7 = arith.constant 0 : i32
    %9 = arith.cmpi eq, %arg2, %c0_i32_7 : i32
    %10 = arith.extui %9 : i1 to i32
    %c0_i32_8 = arith.constant 0 : i32
    %11 = arith.cmpi ne, %10, %c0_i32_8 : i32
    scf.if %11 {
      %c0_9 = arith.constant 0 : index
      %c0_10 = arith.constant 0 : index
      %12 = vector.load %arg4[%c0_9, %c0_10] : memref<1x4096xf32, #tpu.memory_space<vmem>>, vector<1x4096xf32>
      %c0_11 = arith.constant 0 : index
      %c0_12 = arith.constant 0 : index
      %13 = vector.load %arg6[%c0_11, %c0_12] : memref<2x4096xf32, #tpu.memory_space<vmem>>, vector<2x4096xf32>
      %14 = vector.broadcast %12 : vector<1x4096xf32> to vector<2x4096xf32>
      %15 = arith.mulf %13, %14 : vector<2x4096xf32>
      %cst_13 = arith.constant dense<0.000000e+00> : vector<2xf32>
      %16 = vector.multi_reduction <add>, %15, %cst_13 [1] : vector<2x4096xf32> to vector<2xf32>
      %17 = vector.shape_cast %16 : vector<2xf32> to vector<2x1xf32>
      %18 = vector.shape_cast %17 : vector<2x1xf32> to vector<1x2x1xf32>
      %c0_14 = arith.constant 0 : index
      %c0_15 = arith.constant 0 : index
      %c0_16 = arith.constant 0 : index
      %19 = vector.load %arg5[%c0_14, %c0_15, %c0_16] : memref<1x2x1xf32, #tpu.memory_space<vmem>>, vector<1x2x1xf32>
      tpu.vector_store %arg5[%c0_14, %c0_15, %c0_16], %18 {strides = array<i32>} : memref<1x2x1xf32, #tpu.memory_space<vmem>>, vector<1x2x1xf32>,
    } else {
    }
    return
  }
  func.func @transform_0(%arg0: i32, %arg1: i32, %arg2: i32) -> (i32, i32, i32) {
    %c1_i32 = arith.constant 1 : i32
    %0 = arith.muli %arg0, %c1_i32 : i32
    %1 = arith.addi %0, %arg2 : i32
    %c0_i32 = arith.constant 0 : i32
    %c0_i32_0 = arith.constant 0 : i32
    return %arg1, %1, %c0_i32 : i32, i32, i32
  }
  func.func @transform_1(%arg0: i32, %arg1: i32, %arg2: i32) -> (i32, i32) {
    %c0_i32 = arith.constant 0 : i32
    %c0_i32_0 = arith.constant 0 : i32
    %c0_i32_1 = arith.constant 0 : i32
    return %c0_i32, %c0_i32_0 : i32, i32
  }
  func.func @transform_2(%arg0: i32, %arg1: i32, %arg2: i32) -> (i32, i32, i32) {
    %c0_i32 = arith.constant 0 : i32
    %c0_i32_0 = arith.constant 0 : i32
    return %arg0, %arg1, %c0_i32 : i32, i32, i32
  }
}

</mosaic_0001>

<llo_original>
// kernel: tpu_custom_call.1
$region0: #{tpu_custom_call.1}
  #allocation0 [shape = 'u32[]', space=smem, size = 0x4, offset = 0x4, fixed_abs, tag = 'smem constant byte address 0x4 - core index']
  #allocation1 [shape = 'u32[144,128]{1,0:T(1,128)}', space=vmem, size = 0x12000, scoped, tag = 'internal scratch']
  #allocation2 [shape = 'f32[2,4096]{1,0:T(2,128)}', space=vmem, size = 0x8000, scoped, tag = 'scratch operand']
  %s0 = inlined_call_operand.hbm [shape: bf16[2,8,4096], index: 0, kind: input, shape index: {}]
  %s1 = inlined_call_operand.hbm [shape: f32[1,4096], index: 1, kind: input, shape index: {}]
  %s2 = inlined_call_operand.vmem [shape: f32[1,2,1], index: 2, kind: output, shape index: {}]
  %s3 = sld [smem:[#allocation0]]
  $region34: #{tpu_custom_call.1} parent=0
    _
  %s5 = ssub.s32 1, %s3
  %s6 = scalar_select 0, %s5, %s3
  $region1: #{tpu_custom_call.1} parent=0
    #allocation3 [shape = 'u8[131072]{0}', space=vmem, size = 0x20000, scoped, tag = 'input window, operand 0, single buffered']
    #allocation4 [shape = 's32[1]{0}', space=sflag, size = 0x4, scoped, tag = 'scoped memory for tpu_custom_call.1']
    #allocation5 [shape = 'u8[16384]{0}', space=vmem, size = 0x4000, scoped, tag = 'input window, operand 1, single buffered']
    #allocation6 [shape = 's32[1]{0}', space=sflag, size = 0x4, scoped, tag = 'scoped memory for tpu_custom_call.1']
    %7 = vsyncpa [#allocation4], 0
    %8 = vsyncpa [#allocation6], 0
    // Predicated region
    $region2: #{tpu_custom_call.1} parent=1 // pred_check
      _
    $region3: #{tpu_custom_call.1} parent=1 // pred_check_branch
      %10 = sbr.rel (0) target = $region5
    $region4: #{tpu_custom_call.1} parent=1 // pred_region
      %s11 = sadd.s32 0, 0
      %s13 = ssub.s32 4096, 4096
      %14 = vsyncadd [#allocation4], %s13
      %s15 = smul.addr %s11, 32
      %s16 = smul.addr %s15, 64
      %s17 = scalar_lea.hbm %s0, %s16
      %s18 = sshll.u32 [#allocation3], 4
      %s19 = int_to_ptr.vmem [resolvable:$true] %s18
      %24 = dma.hbm_to_vmem [thread:$0]  %s17, 4096, %s19, [#allocation4], 2048, 2048, 128
    $region5: #{tpu_custom_call.1} parent=1 // pred_fallthru
      _
    // Predicated region
    $region6: #{tpu_custom_call.1} parent=1 // pred_check
      _
    $region7: #{tpu_custom_call.1} parent=1 // pred_check_branch
      %26 = sbr.rel (0) target = $region9
    $region8: #{tpu_custom_call.1} parent=1 // pred_region
      %s28 = ssub.s32 512, 512
      %29 = vsyncadd [#allocation6], %s28
      %s31 = sshll.u32 [#allocation5], 4
      %s32 = int_to_ptr.vmem [resolvable:$true] %s31
      %34 = dma.hbm_to_vmem [thread:$0]  %s1, 512, %s32, [#allocation6]
    $region9: #{tpu_custom_call.1} parent=1 // pred_fallthru
      _
    // Predicated region
    $region10: #{tpu_custom_call.1} parent=1 // pred_check
      _
    $region11: #{tpu_custom_call.1} parent=1 // pred_check_branch
      %36 = sbr.rel (0) target = $region13
    $region12: #{tpu_custom_call.1} parent=1 // pred_region
      %37 = dma.done [#allocation4], 4096
    $region13: #{tpu_custom_call.1} parent=1 // pred_fallthru
      _
    // Predicated region
    $region14: #{tpu_custom_call.1} parent=1 // pred_check
      _
    $region15: #{tpu_custom_call.1} parent=1 // pred_check_branch
      %39 = sbr.rel (0) target = $region17
    $region16: #{tpu_custom_call.1} parent=1 // pred_region
      %40 = dma.done [#allocation6], 512
    $region17: #{tpu_custom_call.1} parent=1 // pred_fallthru
      _
    %s41 = sadd.s32 0, 0
    %p42 = scmp.eq.s32.totalorder 0, 0
    // Predicated region
    $region18: #{tpu_custom_call.1} parent=1 // pred_check
      %p43 = pneg %p42
    $region19: #{tpu_custom_call.1} parent=1 // pred_check_branch
      %45 = sbr.rel (%p43) target = $region21
    $region20: #{tpu_custom_call.1} parent=1 // pred_region
      %46 = vst [vmem:[#allocation2] sm:$0xff] 0.0
      %47 = vst [vmem:[#allocation2 + $0x8] sm:$0xff] 0.0
      %48 = vst [vmem:[#allocation2 + $0x10] sm:$0xff] 0.0
      %49 = vst [vmem:[#allocation2 + $0x18] sm:$0xff] 0.0
      %50 = vst [vmem:[#allocation2 + $0x20] sm:$0xff] 0.0
      %51 = vst [vmem:[#allocation2 + $0x28] sm:$0xff] 0.0
      %52 = vst [vmem:[#allocation2 + $0x30] sm:$0xff] 0.0
      %53 = vst [vmem:[#allocation2 + $0x38] sm:$0xff] 0.0
    $region21: #{tpu_custom_call.1} parent=1 // pred_fallthru
      _
    %v54 = vld [vmem:[#allocation3] sm:$0xff]
    %v55 = vld [vmem:[#allocation3 + $0x8] sm:$0xff]
    %v56 = vld [vmem:[#allocation3 + $0x10] sm:$0xff]
    %v57 = vld [vmem:[#allocation3 + $0x18] sm:$0xff]
    %v58 = vld [vmem:[#allocation3 + $0x20] sm:$0xff]
    %v59 = vld [vmem:[#allocation3 + $0x28] sm:$0xff]
    %v60 = vld [vmem:[#allocation3 + $0x30] sm:$0xff]
    %v61 = vld [vmem:[#allocation3 + $0x38] sm:$0xff]
    %v62 = vld [vmem:[#allocation3 + $0x40] sm:$0xff]
    %v63 = vld [vmem:[#allocation3 + $0x48] sm:$0xff]
    %v64 = vld [vmem:[#allocation3 + $0x50] sm:$0xff]
    %v65 = vld [vmem:[#allocation3 + $0x58] sm:$0xff]
    %v66 = vld [vmem:[#allocation3 + $0x60] sm:$0xff]
    %v67 = vld [vmem:[#allocation3 + $0x68] sm:$0xff]
    %v68 = vld [vmem:[#allocation3 + $0x70] sm:$0xff]
    %v69 = vld [vmem:[#allocation3 + $0x78] sm:$0xff]
    %v70 = vld [vmem:[#allocation3 + $0x80] sm:$0xff]
    %v71 = vld [vmem:[#allocation3 + $0x88] sm:$0xff]
    %v72 = vld [vmem:[#allocation3 + $0x90] sm:$0xff]
    %v73 = vld [vmem:[#allocation3 + $0x98] sm:$0xff]
    %v74 = vld [vmem:[#allocation3 + $0xa0] sm:$0xff]
    %v75 = vld [vmem:[#allocation3 + $0xa8] sm:$0xff]
    %v76 = vld [vmem:[#allocation3 + $0xb0] sm:$0xff]
    %v77 = vld [vmem:[#allocation3 + $0xb8] sm:$0xff]
    %v78 = vld [vmem:[#allocation3 + $0xc0] sm:$0xff]
    %v79 = vld [vmem:[#allocation3 + $0xc8] sm:$0xff]
    %v80 = vld [vmem:[#allocation3 + $0xd0] sm:$0xff]
    %v81 = vld [vmem:[#allocation3 + $0xd8] sm:$0xff]
    %v82 = vld [vmem:[#allocation3 + $0xe0] sm:$0xff]
    %v83 = vld [vmem:[#allocation3 + $0xe8] sm:$0xff]
    %v84 = vld [vmem:[#allocation3 + $0xf0] sm:$0xff]
    %v85 = vld [vmem:[#allocation3 + $0xf8] sm:$0xff]
    %v86 = vunpack.c.l.bf16 %v54
    %v87 = vunpack.c.h.bf16 %v54
    %v88 = vunpack.c.l.bf16 %v55
    %v89 = vunpack.c.h.bf16 %v55
    %v90 = vunpack.c.l.bf16 %v56
    %v91 = vunpack.c.h.bf16 %v56
    %v92 = vunpack.c.l.bf16 %v57
    %v93 = vunpack.c.h.bf16 %v57
    %v94 = vunpack.c.l.bf16 %v58
    %v95 = vunpack.c.h.bf16 %v58
    %v96 = vunpack.c.l.bf16 %v59
    %v97 = vunpack.c.h.bf16 %v59
    %v98 = vunpack.c.l.bf16 %v60
    %v99 = vunpack.c.h.bf16 %v60
    %v100 = vunpack.c.l.bf16 %v61
    %v101 = vunpack.c.h.bf16 %v61
    %v102 = vunpack.c.l.bf16 %v62
    %v103 = vunpack.c.h.bf16 %v62
    %v104 = vunpack.c.l.bf16 %v63
    %v105 = vunpack.c.h.bf16 %v63
    %v106 = vunpack.c.l.bf16 %v64
    %v107 = vunpack.c.h.bf16 %v64
    %v108 = vunpack.c.l.bf16 %v65
    %v109 = vunpack.c.h.bf16 %v65
    %v110 = vunpack.c.l.bf16 %v66
    %v111 = vunpack.c.h.bf16 %v66
    %v112 = vunpack.c.l.bf16 %v67
    %v113 = vunpack.c.h.bf16 %v67
    %v114 = vunpack.c.l.bf16 %v68
    %v115 = vunpack.c.h.bf16 %v68
    %v116 = vunpack.c.l.bf16 %v69
    %v117 = vunpack.c.h.bf16 %v69
    %v118 = vunpack.c.l.bf16 %v70
    %v119 = vunpack.c.h.bf16 %v70
    %v120 = vunpack.c.l.bf16 %v71
    %v121 = vunpack.c.h.bf16 %v71
    %v122 = vunpack.c.l.bf16 %v72
    %v123 = vunpack.c.h.bf16 %v72
    %v124 = vunpack.c.l.bf16 %v73
    %v125 = vunpack.c.h.bf16 %v73
    %v126 = vunpack.c.l.bf16 %v74
    %v127 = vunpack.c.h.bf16 %v74
    %v128 = vunpack.c.l.bf16 %v75
    %v129 = vunpack.c.h.bf16 %v75
    %v130 = vunpack.c.l.bf16 %v76
    %v131 = vunpack.c.h.bf16 %v76
    %v132 = vunpack.c.l.bf16 %v77
    %v133 = vunpack.c.h.bf16 %v77
    %v134 = vunpack.c.l.bf16 %v78
    %v135 = vunpack.c.h.bf16 %v78
    %v136 = vunpack.c.l.bf16 %v79
    %v137 = vunpack.c.h.bf16 %v79
    %v138 = vunpack.c.l.bf16 %v80
    %v139 = vunpack.c.h.bf16 %v80
    %v140 = vunpack.c.l.bf16 %v81
    %v141 = vunpack.c.h.bf16 %v81
    %v142 = vunpack.c.l.bf16 %v82
    %v143 = vunpack.c.h.bf16 %v82
    %v144 = vunpack.c.l.bf16 %v83
    %v145 = vunpack.c.h.bf16 %v83
    %v146 = vunpack.c.l.bf16 %v84
    %v147 = vunpack.c.h.bf16 %v84
    %v148 = vunpack.c.l.bf16 %v85
    %v149 = vunpack.c.h.bf16 %v85
    %v150 = vld [vmem:[#allocation2] sm:$0xff]
    %v151 = vld [vmem:[#allocation2 + $0x8] sm:$0xff]
    %v152 = vld [vmem:[#allocation2 + $0x10] sm:$0xff]
    %v153 = vld [vmem:[#allocation2 + $0x18] sm:$0xff]
    %v154 = vld [vmem:[#allocation2 + $0x20] sm:$0xff]
    %v155 = vld [vmem:[#allocation2 + $0x28] sm:$0xff]
    %v156 = vld [vmem:[#allocation2 + $0x30] sm:$0xff]
    %v157 = vld [vmem:[#allocation2 + $0x38] sm:$0xff]
    %v158 = vrot.slane %v86, 4
    %v159 = vadd.f32 %v86, %v158
    %v160 = vrot.slane %v159, 2
    %v161 = vadd.f32 %v159, %v160
    %v162 = vrot.slane %v161, 1
    %v163 = vadd.f32 %v161, %v162
    %v164 = vrot.slane %v87, 4
    %v165 = vadd.f32 %v87, %v164
    %v166 = vrot.slane %v165, 2
    %v167 = vadd.f32 %v165, %v166
    %v168 = vrot.slane %v167, 1
    %v169 = vadd.f32 %v167, %v168
    %v170 = vrot.slane %v88, 4
    %v171 = vadd.f32 %v88, %v170
    %v172 = vrot.slane %v171, 2
    %v173 = vadd.f32 %v171, %v172
    %v174 = vrot.slane %v173, 1
    %v175 = vadd.f32 %v173, %v174
    %v176 = vrot.slane %v89, 4
    %v177 = vadd.f32 %v89, %v176
    %v178 = vrot.slane %v177, 2
    %v179 = vadd.f32 %v177, %v178
    %v180 = vrot.slane %v179, 1
    %v181 = vadd.f32 %v179, %v180
    %v182 = vrot.slane %v90, 4
    %v183 = vadd.f32 %v90, %v182
    %v184 = vrot.slane %v183, 2
    %v185 = vadd.f32 %v183, %v184
    %v186 = vrot.slane %v185, 1
    %v187 = vadd.f32 %v185, %v186
    %v188 = vrot.slane %v91, 4
    %v189 = vadd.f32 %v91, %v188
    %v190 = vrot.slane %v189, 2
    %v191 = vadd.f32 %v189, %v190
    %v192 = vrot.slane %v191, 1
    %v193 = vadd.f32 %v191, %v192
    %v194 = vrot.slane %v92, 4
    %v195 = vadd.f32 %v92, %v194
    %v196 = vrot.slane %v195, 2
    %v197 = vadd.f32 %v195, %v196
    %v198 = vrot.slane %v197, 1
    %v199 = vadd.f32 %v197, %v198
    %v200 = vrot.slane %v93, 4
    %v201 = vadd.f32 %v93, %v200
    %v202 = vrot.slane %v201, 2
    %v203 = vadd.f32 %v201, %v202
    %v204 = vrot.slane %v203, 1
    %v205 = vadd.f32 %v203, %v204
    %v206 = vrot.slane %v94, 4
    %v207 = vadd.f32 %v94, %v206
    %v208 = vrot.slane %v207, 2
    %v209 = vadd.f32 %v207, %v208
    %v210 = vrot.slane %v209, 1
    %v211 = vadd.f32 %v209, %v210
    %v212 = vrot.slane %v95, 4
    %v213 = vadd.f32 %v95, %v212
    %v214 = vrot.slane %v213, 2
    %v215 = vadd.f32 %v213, %v214
    %v216 = vrot.slane %v215, 1
    %v217 = vadd.f32 %v215, %v216
    %v218 = vrot.slane %v96, 4
    %v219 = vadd.f32 %v96, %v218
    %v220 = vrot.slane %v219, 2
    %v221 = vadd.f32 %v219, %v220
    %v222 = vrot.slane %v221, 1
    %v223 = vadd.f32 %v221, %v222
    %v224 = vrot.slane %v97, 4
    %v225 = vadd.f32 %v97, %v224
    %v226 = vrot.slane %v225, 2
    %v227 = vadd.f32 %v225, %v226
    %v228 = vrot.slane %v227, 1
    %v229 = vadd.f32 %v227, %v228
    %v230 = vrot.slane %v98, 4
    %v231 = vadd.f32 %v98, %v230
    %v232 = vrot.slane %v231, 2
    %v233 = vadd.f32 %v231, %v232
    %v234 = vrot.slane %v233, 1
    %v235 = vadd.f32 %v233, %v234
    %v236 = vrot.slane %v99, 4
    %v237 = vadd.f32 %v99, %v236
    %v238 = vrot.slane %v237, 2
    %v239 = vadd.f32 %v237, %v238
    %v240 = vrot.slane %v239, 1
    %v241 = vadd.f32 %v239, %v240
    %v242 = vrot.slane %v100, 4
    %v243 = vadd.f32 %v100, %v242
    %v244 = vrot.slane %v243, 2
    %v245 = vadd.f32 %v243, %v244
    %v246 = vrot.slane %v245, 1
    %v247 = vadd.f32 %v245, %v246
    %v248 = vrot.slane %v101, 4
    %v249 = vadd.f32 %v101, %v248
    %v250 = vrot.slane %v249, 2
    %v251 = vadd.f32 %v249, %v250
    %v252 = vrot.slane %v251, 1
    %v253 = vadd.f32 %v251, %v252
    %v254 = vrot.slane %v102, 4
    %v255 = vadd.f32 %v102, %v254
    %v256 = vrot.slane %v255, 2
    %v257 = vadd.f32 %v255, %v256
    %v258 = vrot.slane %v257, 1
    %v259 = vadd.f32 %v257, %v258
    %v260 = vrot.slane %v103, 4
    %v261 = vadd.f32 %v103, %v260
    %v262 = vrot.slane %v261, 2
    %v263 = vadd.f32 %v261, %v262
    %v264 = vrot.slane %v263, 1
    %v265 = vadd.f32 %v263, %v264
    %v266 = vrot.slane %v104, 4
    %v267 = vadd.f32 %v104, %v266
    %v268 = vrot.slane %v267, 2
    %v269 = vadd.f32 %v267, %v268
    %v270 = vrot.slane %v269, 1
    %v271 = vadd.f32 %v269, %v270
    %v272 = vrot.slane %v105, 4
    %v273 = vadd.f32 %v105, %v272
    %v274 = vrot.slane %v273, 2
    %v275 = vadd.f32 %v273, %v274
    %v276 = vrot.slane %v275, 1
    %v277 = vadd.f32 %v275, %v276
    %v278 = vrot.slane %v106, 4
    %v279 = vadd.f32 %v106, %v278
    %v280 = vrot.slane %v279, 2
    %v281 = vadd.f32 %v279, %v280
    %v282 = vrot.slane %v281, 1
    %v283 = vadd.f32 %v281, %v282
    %v284 = vrot.slane %v107, 4
    %v285 = vadd.f32 %v107, %v284
    %v286 = vrot.slane %v285, 2
    %v287 = vadd.f32 %v285, %v286
    %v288 = vrot.slane %v287, 1
    %v289 = vadd.f32 %v287, %v288
    %v290 = vrot.slane %v108, 4
    %v291 = vadd.f32 %v108, %v290
    %v292 = vrot.slane %v291, 2
    %v293 = vadd.f32 %v291, %v292
    %v294 = vrot.slane %v293, 1
    %v295 = vadd.f32 %v293, %v294
    %v296 = vrot.slane %v109, 4
    %v297 = vadd.f32 %v109, %v296
    %v298 = vrot.slane %v297, 2
    %v299 = vadd.f32 %v297, %v298
    %v300 = vrot.slane %v299, 1
    %v301 = vadd.f32 %v299, %v300
    %v302 = vrot.slane %v110, 4
    %v303 = vadd.f32 %v110, %v302
    %v304 = vrot.slane %v303, 2
    %v305 = vadd.f32 %v303, %v304
    %v306 = vrot.slane %v305, 1
    %v307 = vadd.f32 %v305, %v306
    %v308 = vrot.slane %v111, 4
    %v309 = vadd.f32 %v111, %v308
    %v310 = vrot.slane %v309, 2
    %v311 = vadd.f32 %v309, %v310
    %v312 = vrot.slane %v311, 1
    %v313 = vadd.f32 %v311, %v312
    %v314 = vrot.slane %v112, 4
    %v315 = vadd.f32 %v112, %v314
    %v316 = vrot.slane %v315, 2
    %v317 = vadd.f32 %v315, %v316
    %v318 = vrot.slane %v317, 1
    %v319 = vadd.f32 %v317, %v318
    %v320 = vrot.slane %v113, 4
    %v321 = vadd.f32 %v113, %v320
    %v322 = vrot.slane %v321, 2
    %v323 = vadd.f32 %v321, %v322
    %v324 = vrot.slane %v323, 1
    %v325 = vadd.f32 %v323, %v324
    %v326 = vrot.slane %v114, 4
    %v327 = vadd.f32 %v114, %v326
    %v328 = vrot.slane %v327, 2
    %v329 = vadd.f32 %v327, %v328
    %v330 = vrot.slane %v329, 1
    %v331 = vadd.f32 %v329, %v330
    %v332 = vrot.slane %v115, 4
    %v333 = vadd.f32 %v115, %v332
    %v334 = vrot.slane %v333, 2
    %v335 = vadd.f32 %v333, %v334
    %v336 = vrot.slane %v335, 1
    %v337 = vadd.f32 %v335, %v336
    %v338 = vrot.slane %v116, 4
    %v339 = vadd.f32 %v116, %v338
    %v340 = vrot.slane %v339, 2
    %v341 = vadd.f32 %v339, %v340
    %v342 = vrot.slane %v341, 1
    %v343 = vadd.f32 %v341, %v342
    %v344 = vrot.slane %v117, 4
    %v345 = vadd.f32 %v117, %v344
    %v346 = vrot.slane %v345, 2
    %v347 = vadd.f32 %v345, %v346
    %v348 = vrot.slane %v347, 1
    %v349 = vadd.f32 %v347, %v348
    %v350 = vrot.slane %v118, 4
    %v351 = vadd.f32 %v118, %v350
    %v352 = vrot.slane %v351, 2
    %v353 = vadd.f32 %v351, %v352
    %v354 = vrot.slane %v353, 1
    %v355 = vadd.f32 %v353, %v354
    %v356 = vrot.slane %v119, 4
    %v357 = vadd.f32 %v119, %v356
    %v358 = vrot.slane %v357, 2
    %v359 = vadd.f32 %v357, %v358
    %v360 = vrot.slane %v359, 1
    %v361 = vadd.f32 %v359, %v360
    %v362 = vrot.slane %v120, 4
    %v363 = vadd.f32 %v120, %v362
    %v364 = vrot.slane %v363, 2
    %v365 = vadd.f32 %v363, %v364
    %v366 = vrot.slane %v365, 1
    %v367 = vadd.f32 %v365, %v366
    %v368 = vrot.slane %v121, 4
    %v369 = vadd.f32 %v121, %v368
    %v370 = vrot.slane %v369, 2
    %v371 = vadd.f32 %v369, %v370
    %v372 = vrot.slane %v371, 1
    %v373 = vadd.f32 %v371, %v372
    %v374 = vrot.slane %v122, 4
    %v375 = vadd.f32 %v122, %v374
    %v376 = vrot.slane %v375, 2
    %v377 = vadd.f32 %v375, %v376
    %v378 = vrot.slane %v377, 1
    %v379 = vadd.f32 %v377, %v378
    %v380 = vrot.slane %v123, 4
    %v381 = vadd.f32 %v123, %v380
    %v382 = vrot.slane %v381, 2
    %v383 = vadd.f32 %v381, %v382
    %v384 = vrot.slane %v383, 1
    %v385 = vadd.f32 %v383, %v384
    %v386 = vrot.slane %v124, 4
    %v387 = vadd.f32 %v124, %v386
    %v388 = vrot.slane %v387, 2
    %v389 = vadd.f32 %v387, %v388
    %v390 = vrot.slane %v389, 1
    %v391 = vadd.f32 %v389, %v390
    %v392 = vrot.slane %v125, 4
    %v393 = vadd.f32 %v125, %v392
    %v394 = vrot.slane %v393, 2
    %v395 = vadd.f32 %v393, %v394
    %v396 = vrot.slane %v395, 1
    %v397 = vadd.f32 %v395, %v396
    %v398 = vrot.slane %v126, 4
    %v399 = vadd.f32 %v126, %v398
    %v400 = vrot.slane %v399, 2
    %v401 = vadd.f32 %v399, %v400
    %v402 = vrot.slane %v401, 1
    %v403 = vadd.f32 %v401, %v402
    %v404 = vrot.slane %v127, 4
    %v405 = vadd.f32 %v127, %v404
    %v406 = vrot.slane %v405, 2
    %v407 = vadd.f32 %v405, %v406
    %v408 = vrot.slane %v407, 1
    %v409 = vadd.f32 %v407, %v408
    %v410 = vrot.slane %v128, 4
    %v411 = vadd.f32 %v128, %v410
    %v412 = vrot.slane %v411, 2
    %v413 = vadd.f32 %v411, %v412
    %v414 = vrot.slane %v413, 1
    %v415 = vadd.f32 %v413, %v414
    %v416 = vrot.slane %v129, 4
    %v417 = vadd.f32 %v129, %v416
    %v418 = vrot.slane %v417, 2
    %v419 = vadd.f32 %v417, %v418
    %v420 = vrot.slane %v419, 1
    %v421 = vadd.f32 %v419, %v420
    %v422 = vrot.slane %v130, 4
    %v423 = vadd.f32 %v130, %v422
    %v424 = vrot.slane %v423, 2
    %v425 = vadd.f32 %v423, %v424
    %v426 = vrot.slane %v425, 1
    %v427 = vadd.f32 %v425, %v426
    %v428 = vrot.slane %v131, 4
    %v429 = vadd.f32 %v131, %v428
    %v430 = vrot.slane %v429, 2
    %v431 = vadd.f32 %v429, %v430
    %v432 = vrot.slane %v431, 1
    %v433 = vadd.f32 %v431, %v432
    %v434 = vrot.slane %v132, 4
    %v435 = vadd.f32 %v132, %v434
    %v436 = vrot.slane %v435, 2
    %v437 = vadd.f32 %v435, %v436
    %v438 = vrot.slane %v437, 1
    %v439 = vadd.f32 %v437, %v438
    %v440 = vrot.slane %v133, 4
    %v441 = vadd.f32 %v133, %v440
    %v442 = vrot.slane %v441, 2
    %v443 = vadd.f32 %v441, %v442
    %v444 = vrot.slane %v443, 1
    %v445 = vadd.f32 %v443, %v444
    %v446 = vrot.slane %v134, 4
    %v447 = vadd.f32 %v134, %v446
    %v448 = vrot.slane %v447, 2
    %v449 = vadd.f32 %v447, %v448
    %v450 = vrot.slane %v449, 1
    %v451 = vadd.f32 %v449, %v450
    %v452 = vrot.slane %v135, 4
    %v453 = vadd.f32 %v135, %v452
    %v454 = vrot.slane %v453, 2
    %v455 = vadd.f32 %v453, %v454
    %v456 = vrot.slane %v455, 1
    %v457 = vadd.f32 %v455, %v456
    %v458 = vrot.slane %v136, 4
    %v459 = vadd.f32 %v136, %v458
    %v460 = vrot.slane %v459, 2
    %v461 = vadd.f32 %v459, %v460
    %v462 = vrot.slane %v461, 1
    %v463 = vadd.f32 %v461, %v462
    %v464 = vrot.slane %v137, 4
    %v465 = vadd.f32 %v137, %v464
    %v466 = vrot.slane %v465, 2
    %v467 = vadd.f32 %v465, %v466
    %v468 = vrot.slane %v467, 1
    %v469 = vadd.f32 %v467, %v468
    %v470 = vrot.slane %v138, 4
    %v471 = vadd.f32 %v138, %v470
    %v472 = vrot.slane %v471, 2
    %v473 = vadd.f32 %v471, %v472
    %v474 = vrot.slane %v473, 1
    %v475 = vadd.f32 %v473, %v474
    %v476 = vrot.slane %v139, 4
    %v477 = vadd.f32 %v139, %v476
    %v478 = vrot.slane %v477, 2
    %v479 = vadd.f32 %v477, %v478
    %v480 = vrot.slane %v479, 1
    %v481 = vadd.f32 %v479, %v480
    %v482 = vrot.slane %v140, 4
    %v483 = vadd.f32 %v140, %v482
    %v484 = vrot.slane %v483, 2
    %v485 = vadd.f32 %v483, %v484
    %v486 = vrot.slane %v485, 1
    %v487 = vadd.f32 %v485, %v486
    %v488 = vrot.slane %v141, 4
    %v489 = vadd.f32 %v141, %v488
    %v490 = vrot.slane %v489, 2
    %v491 = vadd.f32 %v489, %v490
    %v492 = vrot.slane %v491, 1
    %v493 = vadd.f32 %v491, %v492
    %v494 = vrot.slane %v142, 4
    %v495 = vadd.f32 %v142, %v494
    %v496 = vrot.slane %v495, 2
    %v497 = vadd.f32 %v495, %v496
    %v498 = vrot.slane %v497, 1
    %v499 = vadd.f32 %v497, %v498
    %v500 = vrot.slane %v143, 4
    %v501 = vadd.f32 %v143, %v500
    %v502 = vrot.slane %v501, 2
    %v503 = vadd.f32 %v501, %v502
    %v504 = vrot.slane %v503, 1
    %v505 = vadd.f32 %v503, %v504
    %v506 = vrot.slane %v144, 4
    %v507 = vadd.f32 %v144, %v506
    %v508 = vrot.slane %v507, 2
    %v509 = vadd.f32 %v507, %v508
    %v510 = vrot.slane %v509, 1
    %v511 = vadd.f32 %v509, %v510
    %v512 = vrot.slane %v145, 4
    %v513 = vadd.f32 %v145, %v512
    %v514 = vrot.slane %v513, 2
    %v515 = vadd.f32 %v513, %v514
    %v516 = vrot.slane %v515, 1
    %v517 = vadd.f32 %v515, %v516
    %v518 = vrot.slane %v146, 4
    %v519 = vadd.f32 %v146, %v518
    %v520 = vrot.slane %v519, 2
    %v521 = vadd.f32 %v519, %v520
    %v522 = vrot.slane %v521, 1
    %v523 = vadd.f32 %v521, %v522
    %v524 = vrot.slane %v147, 4
    %v525 = vadd.f32 %v147, %v524
    %v526 = vrot.slane %v525, 2
    %v527 = vadd.f32 %v525, %v526
    %v528 = vrot.slane %v527, 1
    %v529 = vadd.f32 %v527, %v528
    %v530 = vrot.slane %v148, 4
    %v531 = vadd.f32 %v148, %v530
    %v532 = vrot.slane %v531, 2
    %v533 = vadd.f32 %v531, %v532
    %v534 = vrot.slane %v533, 1
    %v535 = vadd.f32 %v533, %v534
    %v536 = vrot.slane %v149, 4
    %v537 = vadd.f32 %v149, %v536
    %v538 = vrot.slane %v537, 2
    %v539 = vadd.f32 %v537, %v538
    %v540 = vrot.slane %v539, 1
    %v541 = vadd.f32 %v539, %v540
    %v606 = vcombine.low %v163, %v169
    %v607 = vcombine.low %v175, %v181
    %v609 = vunpack.c.l.s4 1983009808
    %v610 = vunpack.c.0.s8 %v609
    %v611 = vlaneseq
    %v612 = vshrl.u32 %v611, 7
    %v613 = vsub.s32 %v610, %v612
    %v614 = vrot.slane %v606, %v613
    %v616 = vunpack.c.l.s4 1983009808
    %v617 = vunpack.c.0.s8 %v616
    %v618 = vlaneseq
    %v619 = vshrl.u32 %v618, 7
    %v620 = vsub.s32 %v617, %v619
    %v621 = vrot.slane %v607, %v620
    %v622 = vcombine.low %v614, %v621
    %v623 = vcombine.low %v187, %v193
    %v624 = vcombine.low %v199, %v205
    %v626 = vunpack.c.l.s4 1983009808
    %v627 = vunpack.c.0.s8 %v626
    %v628 = vlaneseq
    %v629 = vshrl.u32 %v628, 7
    %v630 = vsub.s32 %v627, %v629
    %v631 = vrot.slane %v623, %v630
    %v633 = vunpack.c.l.s4 1983009808
    %v634 = vunpack.c.0.s8 %v633
    %v635 = vlaneseq
    %v636 = vshrl.u32 %v635, 7
    %v637 = vsub.s32 %v634, %v636
    %v638 = vrot.slane %v624, %v637
    %v639 = vcombine.low %v631, %v638
    %v640 = vcombine.low %v211, %v217
    %v641 = vcombine.low %v223, %v229
    %v643 = vunpack.c.l.s4 1983009808
    %v644 = vunpack.c.0.s8 %v643
    %v645 = vlaneseq
    %v646 = vshrl.u32 %v645, 7
    %v647 = vsub.s32 %v644, %v646
    %v648 = vrot.slane %v640, %v647
    %v650 = vunpack.c.l.s4 1983009808
    %v651 = vunpack.c.0.s8 %v650
    %v652 = vlaneseq
    %v653 = vshrl.u32 %v652, 7
    %v654 = vsub.s32 %v651, %v653
    %v655 = vrot.slane %v641, %v654
    %v656 = vcombine.low %v648, %v655
    %v657 = vcombine.low %v235, %v241
    %v658 = vcombine.low %v247, %v253
    %v660 = vunpack.c.l.s4 1983009808
    %v661 = vunpack.c.0.s8 %v660
    %v662 = vlaneseq
    %v663 = vshrl.u32 %v662, 7
    %v664 = vsub.s32 %v661, %v663
    %v665 = vrot.slane %v657, %v664
    %v667 = vunpack.c.l.s4 1983009808
    %v668 = vunpack.c.0.s8 %v667
    %v669 = vlaneseq
    %v670 = vshrl.u32 %v669, 7
    %v671 = vsub.s32 %v668, %v670
    %v672 = vrot.slane %v658, %v671
    %v673 = vcombine.low %v665, %v672
    %v674 = vcombine.low %v259, %v265
    %v675 = vcombine.low %v271, %v277
    %v677 = vunpack.c.l.s4 1983009808
    %v678 = vunpack.c.0.s8 %v677
    %v679 = vlaneseq
    %v680 = vshrl.u32 %v679, 7
    %v681 = vsub.s32 %v678, %v680
    %v682 = vrot.slane %v674, %v681
    %v684 = vunpack.c.l.s4 1983009808
    %v685 = vunpack.c.0.s8 %v684
    %v686 = vlaneseq
    %v687 = vshrl.u32 %v686, 7
    %v688 = vsub.s32 %v685, %v687
    %v689 = vrot.slane %v675, %v688
    %v690 = vcombine.low %v682, %v689
    %v691 = vcombine.low %v283, %v289
    %v692 = vcombine.low %v295, %v301
    %v694 = vunpack.c.l.s4 1983009808
    %v695 = vunpack.c.0.s8 %v694
    %v696 = vlaneseq
    %v697 = vshrl.u32 %v696, 7
    %v698 = vsub.s32 %v695, %v697
    %v699 = vrot.slane %v691, %v698
    %v701 = vunpack.c.l.s4 1983009808
    %v702 = vunpack.c.0.s8 %v701
    %v703 = vlaneseq
    %v704 = vshrl.u32 %v703, 7
    %v705 = vsub.s32 %v702, %v704
    %v706 = vrot.slane %v692, %v705
    %v707 = vcombine.low %v699, %v706
    %v708 = vcombine.low %v307, %v313
    %v709 = vcombine.low %v319, %v325
    %v711 = vunpack.c.l.s4 1983009808
    %v712 = vunpack.c.0.s8 %v711
    %v713 = vlaneseq
    %v714 = vshrl.u32 %v713, 7
    %v715 = vsub.s32 %v712, %v714
    %v716 = vrot.slane %v708, %v715
    %v718 = vunpack.c.l.s4 1983009808
    %v719 = vunpack.c.0.s8 %v718
    %v720 = vlaneseq
    %v721 = vshrl.u32 %v720, 7
    %v722 = vsub.s32 %v719, %v721
    %v723 = vrot.slane %v709, %v722
    %v724 = vcombine.low %v716, %v723
    %v725 = vcombine.low %v331, %v337
    %v726 = vcombine.low %v343, %v349
    %v728 = vunpack.c.l.s4 1983009808
    %v729 = vunpack.c.0.s8 %v728
    %v730 = vlaneseq
    %v731 = vshrl.u32 %v730, 7
    %v732 = vsub.s32 %v729, %v731
    %v733 = vrot.slane %v725, %v732
    %v735 = vunpack.c.l.s4 1983009808
    %v736 = vunpack.c.0.s8 %v735
    %v737 = vlaneseq
    %v738 = vshrl.u32 %v737, 7
    %v739 = vsub.s32 %v736, %v738
    %v740 = vrot.slane %v726, %v739
    %v741 = vcombine.low %v733, %v740
    %v742 = vcombine.low %v355, %v361
    %v743 = vcombine.low %v367, %v373
    %v745 = vunpack.c.l.s4 1983009808
    %v746 = vunpack.c.0.s8 %v745
    %v747 = vlaneseq
    %v748 = vshrl.u32 %v747, 7
    %v749 = vsub.s32 %v746, %v748
    %v750 = vrot.slane %v742, %v749
    %v752 = vunpack.c.l.s4 1983009808
    %v753 = vunpack.c.0.s8 %v752
    %v754 = vlaneseq
    %v755 = vshrl.u32 %v754, 7
    %v756 = vsub.s32 %v753, %v755
    %v757 = vrot.slane %v743, %v756
    %v758 = vcombine.low %v750, %v757
    %v759 = vcombine.low %v379, %v385
    %v760 = vcombine.low %v391, %v397
    %v762 = vunpack.c.l.s4 1983009808
    %v763 = vunpack.c.0.s8 %v762
    %v764 = vlaneseq
    %v765 = vshrl.u32 %v764, 7
    %v766 = vsub.s32 %v763, %v765
    %v767 = vrot.slane %v759, %v766
    %v769 = vunpack.c.l.s4 1983009808
    %v770 = vunpack.c.0.s8 %v769
    %v771 = vlaneseq
    %v772 = vshrl.u32 %v771, 7
    %v773 = vsub.s32 %v770, %v772
    %v774 = vrot.slane %v760, %v773
    %v775 = vcombine.low %v767, %v774
    %v776 = vcombine.low %v403, %v409
    %v777 = vcombine.low %v415, %v421
    %v779 = vunpack.c.l.s4 1983009808
    %v780 = vunpack.c.0.s8 %v779
    %v781 = vlaneseq
    %v782 = vshrl.u32 %v781, 7
    %v783 = vsub.s32 %v780, %v782
    %v784 = vrot.slane %v776, %v783
    %v786 = vunpack.c.l.s4 1983009808
    %v787 = vunpack.c.0.s8 %v786
    %v788 = vlaneseq
    %v789 = vshrl.u32 %v788, 7
    %v790 = vsub.s32 %v787, %v789
    %v791 = vrot.slane %v777, %v790
    %v792 = vcombine.low %v784, %v791
    %v793 = vcombine.low %v427, %v433
    %v794 = vcombine.low %v439, %v445
    %v796 = vunpack.c.l.s4 1983009808
    %v797 = vunpack.c.0.s8 %v796
    %v798 = vlaneseq
    %v799 = vshrl.u32 %v798, 7
    %v800 = vsub.s32 %v797, %v799
    %v801 = vrot.slane %v793, %v800
    %v803 = vunpack.c.l.s4 1983009808
    %v804 = vunpack.c.0.s8 %v803
    %v805 = vlaneseq
    %v806 = vshrl.u32 %v805, 7
    %v807 = vsub.s32 %v804, %v806
    %v808 = vrot.slane %v794, %v807
    %v809 = vcombine.low %v801, %v808
    %v810 = vcombine.low %v451, %v457
    %v811 = vcombine.low %v463, %v469
    %v813 = vunpack.c.l.s4 1983009808
    %v814 = vunpack.c.0.s8 %v813
    %v815 = vlaneseq
    %v816 = vshrl.u32 %v815, 7
    %v817 = vsub.s32 %v814, %v816
    %v818 = vrot.slane %v810, %v817
    %v820 = vunpack.c.l.s4 1983009808
    %v821 = vunpack.c.0.s8 %v820
    %v822 = vlaneseq
    %v823 = vshrl.u32 %v822, 7
    %v824 = vsub.s32 %v821, %v823
    %v825 = vrot.slane %v811, %v824
    %v826 = vcombine.low %v818, %v825
    %v827 = vcombine.low %v475, %v481
    %v828 = vcombine.low %v487, %v493
    %v830 = vunpack.c.l.s4 1983009808
    %v831 = vunpack.c.0.s8 %v830
    %v832 = vlaneseq
    %v833 = vshrl.u32 %v832, 7
    %v834 = vsub.s32 %v831, %v833
    %v835 = vrot.slane %v827, %v834
    %v837 = vunpack.c.l.s4 1983009808
    %v838 = vunpack.c.0.s8 %v837
    %v839 = vlaneseq
    %v840 = vshrl.u32 %v839, 7
    %v841 = vsub.s32 %v838, %v840
    %v842 = vrot.slane %v828, %v841
    %v843 = vcombine.low %v835, %v842
    %v844 = vcombine.low %v499, %v505
    %v845 = vcombine.low %v511, %v517
    %v847 = vunpack.c.l.s4 1983009808
    %v848 = vunpack.c.0.s8 %v847
    %v849 = vlaneseq
    %v850 = vshrl.u32 %v849, 7
    %v851 = vsub.s32 %v848, %v850
    %v852 = vrot.slane %v844, %v851
    %v854 = vunpack.c.l.s4 1983009808
    %v855 = vunpack.c.0.s8 %v854
    %v856 = vlaneseq
    %v857 = vshrl.u32 %v856, 7
    %v858 = vsub.s32 %v855, %v857
    %v859 = vrot.slane %v845, %v858
    %v860 = vcombine.low %v852, %v859
    %v861 = vcombine.low %v523, %v529
    %v862 = vcombine.low %v535, %v541
    %v864 = vunpack.c.l.s4 1983009808
    %v865 = vunpack.c.0.s8 %v864
    %v866 = vlaneseq
    %v867 = vshrl.u32 %v866, 7
    %v868 = vsub.s32 %v865, %v867
    %v869 = vrot.slane %v861, %v868
    %v871 = vunpack.c.l.s4 1983009808
    %v872 = vunpack.c.0.s8 %v871
    %v873 = vlaneseq
    %v874 = vshrl.u32 %v873, 7
    %v875 = vsub.s32 %v872, %v874
    %v876 = vrot.slane %v862, %v875
    %v877 = vcombine.low %v869, %v876
    %vm878 = vcmask 1044484
    %v879 = vsel %vm878, %v622, %v622
    %vm880 = vcmask 1046534
    %v881 = vsel %vm880, %v622, %v879
    %v882 = vrot.slane %v758, 7
    %vm883 = vcmask 1041409
    %v884 = vsel %vm883, %v882, %v881
    %vm885 = vcmask 1043459
    %v886 = vsel %vm885, %v882, %v884
    %vm887 = vcmask 1045509
    %v888 = vsel %vm887, %v882, %v886
    %vm889 = vcmask 1047559
    %v890 = vsel %vm889, %v882, %v888
    %v891 = vsel %vm878, %v639, %v639
    %v892 = vsel %vm880, %v639, %v891
    %v893 = vrot.slane %v775, 7
    %v894 = vsel %vm883, %v893, %v892
    %v895 = vsel %vm885, %v893, %v894
    %v896 = vsel %vm887, %v893, %v895
    %v897 = vsel %vm889, %v893, %v896
    %v898 = vsel %vm878, %v656, %v656
    %v899 = vsel %vm880, %v656, %v898
    %v900 = vrot.slane %v792, 7
    %v901 = vsel %vm883, %v900, %v899
    %v902 = vsel %vm885, %v900, %v901
    %v903 = vsel %vm887, %v900, %v902
    %v904 = vsel %vm889, %v900, %v903
    %v905 = vsel %vm878, %v673, %v673
    %v906 = vsel %vm880, %v673, %v905
    %v907 = vrot.slane %v809, 7
    %v908 = vsel %vm883, %v907, %v906
    %v909 = vsel %vm885, %v907, %v908
    %v910 = vsel %vm887, %v907, %v909
    %v911 = vsel %vm889, %v907, %v910
    %v912 = vsel %vm878, %v690, %v690
    %v913 = vsel %vm880, %v690, %v912
    %v914 = vrot.slane %v826, 7
    %v915 = vsel %vm883, %v914, %v913
    %v916 = vsel %vm885, %v914, %v915
    %v917 = vsel %vm887, %v914, %v916
    %v918 = vsel %vm889, %v914, %v917
    %v919 = vsel %vm878, %v707, %v707
    %v920 = vsel %vm880, %v707, %v919
    %v921 = vrot.slane %v843, 7
    %v922 = vsel %vm883, %v921, %v920
    %v923 = vsel %vm885, %v921, %v922
    %v924 = vsel %vm887, %v921, %v923
    %v925 = vsel %vm889, %v921, %v924
    %v926 = vsel %vm878, %v724, %v724
    %v927 = vsel %vm880, %v724, %v926
    %v928 = vrot.slane %v860, 7
    %v929 = vsel %vm883, %v928, %v927
    %v930 = vsel %vm885, %v928, %v929
    %v931 = vsel %vm887, %v928, %v930
    %v932 = vsel %vm889, %v928, %v931
    %v933 = vsel %vm878, %v741, %v741
    %v934 = vsel %vm880, %v741, %v933
    %v935 = vrot.slane %v877, 7
    %v936 = vsel %vm883, %v935, %v934
    %v937 = vsel %vm885, %v935, %v936
    %v938 = vsel %vm887, %v935, %v937
    %v939 = vsel %vm889, %v935, %v938
    %v948 = vadd.f32 %v150, %v890
    %v949 = vadd.f32 %v151, %v897
    %v950 = vadd.f32 %v152, %v904
    %v951 = vadd.f32 %v153, %v911
    %v952 = vadd.f32 %v154, %v918
    %v953 = vadd.f32 %v155, %v925
    %v954 = vadd.f32 %v156, %v932
    %v955 = vadd.f32 %v157, %v939
    %956 = vst [vmem:[#allocation2] sm:$0xff] %v948
    %957 = vst [vmem:[#allocation2 + $0x8] sm:$0xff] %v949
    %958 = vst [vmem:[#allocation2 + $0x10] sm:$0xff] %v950
    %959 = vst [vmem:[#allocation2 + $0x18] sm:$0xff] %v951
    %960 = vst [vmem:[#allocation2 + $0x20] sm:$0xff] %v952
    %961 = vst [vmem:[#allocation2 + $0x28] sm:$0xff] %v953
    %962 = vst [vmem:[#allocation2 + $0x30] sm:$0xff] %v954
    %963 = vst [vmem:[#allocation2 + $0x38] sm:$0xff] %v955
    // Predicated region
    $region22: #{tpu_custom_call.1} parent=1 // pred_check
      %p964 = pneg %p42
    $region23: #{tpu_custom_call.1} parent=1 // pred_check_branch
      %966 = sbr.rel (%p964) target = $region25
    $region24: #{tpu_custom_call.1} parent=1 // pred_region
      %v967 = vld [vmem:[#allocation5] sm:$0xff]
      %v968 = vld [vmem:[#allocation5 + $0x8] sm:$0xff]
      %v969 = vld [vmem:[#allocation5 + $0x10] sm:$0xff]
      %v970 = vld [vmem:[#allocation5 + $0x18] sm:$0xff]
      %v971 = vld [vmem:[#allocation2] sm:$0xff]
      %v972 = vld [vmem:[#allocation2 + $0x8] sm:$0xff]
      %v973 = vld [vmem:[#allocation2 + $0x10] sm:$0xff]
      %v974 = vld [vmem:[#allocation2 + $0x18] sm:$0xff]
      %v975 = vld [vmem:[#allocation2 + $0x20] sm:$0xff]
      %v976 = vld [vmem:[#allocation2 + $0x28] sm:$0xff]
      %v977 = vld [vmem:[#allocation2 + $0x30] sm:$0xff]
      %v978 = vld [vmem:[#allocation2 + $0x38] sm:$0xff]
      %v983 = vlaneseq
      %v984 = vshrl.u32 %v983, 7
      %v985 = vsub.s32 0, %v984
      %v986 = vrot.slane %v967, %v985
      %v987 = vlaneseq
      %v988 = vshrl.u32 %v987, 7
      %v989 = vsub.s32 1, %v988
      %v990 = vrot.slane %v967, %v989
      %v991 = vlaneseq
      %v992 = vshrl.u32 %v991, 7
      %v993 = vsub.s32 2, %v992
      %v994 = vrot.slane %v967, %v993
      %v995 = vlaneseq
      %v996 = vshrl.u32 %v995, 7
      %v997 = vsub.s32 3, %v996
      %v998 = vrot.slane %v967, %v997
      %v999 = vlaneseq
      %v1000 = vshrl.u32 %v999, 7
      %v1001 = vsub.s32 4, %v1000
      %v1002 = vrot.slane %v967, %v1001
      %v1003 = vlaneseq
      %v1004 = vshrl.u32 %v1003, 7
      %v1005 = vsub.s32 5, %v1004
      %v1006 = vrot.slane %v967, %v1005
      %v1007 = vlaneseq
      %v1008 = vshrl.u32 %v1007, 7
      %v1009 = vsub.s32 6, %v1008
      %v1010 = vrot.slane %v967, %v1009
      %v1011 = vlaneseq
      %v1012 = vshrl.u32 %v1011, 7
      %v1013 = vsub.s32 7, %v1012
      %v1014 = vrot.slane %v967, %v1013
      %v1015 = vlaneseq
      %v1016 = vshrl.u32 %v1015, 7
      %v1017 = vsub.s32 0, %v1016
      %v1018 = vrot.slane %v968, %v1017
      %v1019 = vlaneseq
      %v1020 = vshrl.u32 %v1019, 7
      %v1021 = vsub.s32 1, %v1020
      %v1022 = vrot.slane %v968, %v1021
      %v1023 = vlaneseq
      %v1024 = vshrl.u32 %v1023, 7
      %v1025 = vsub.s32 2, %v1024
      %v1026 = vrot.slane %v968, %v1025
      %v1027 = vlaneseq
      %v1028 = vshrl.u32 %v1027, 7
      %v1029 = vsub.s32 3, %v1028
      %v1030 = vrot.slane %v968, %v1029
      %v1031 = vlaneseq
      %v1032 = vshrl.u32 %v1031, 7
      %v1033 = vsub.s32 4, %v1032
      %v1034 = vrot.slane %v968, %v1033
      %v1035 = vlaneseq
      %v1036 = vshrl.u32 %v1035, 7
      %v1037 = vsub.s32 5, %v1036
      %v1038 = vrot.slane %v968, %v1037
      %v1039 = vlaneseq
      %v1040 = vshrl.u32 %v1039, 7
      %v1041 = vsub.s32 6, %v1040
      %v1042 = vrot.slane %v968, %v1041
      %v1043 = vlaneseq
      %v1044 = vshrl.u32 %v1043, 7
      %v1045 = vsub.s32 7, %v1044
      %v1046 = vrot.slane %v968, %v1045
      %v1047 = vlaneseq
      %v1048 = vshrl.u32 %v1047, 7
      %v1049 = vsub.s32 0, %v1048
      %v1050 = vrot.slane %v969, %v1049
      %v1051 = vlaneseq
      %v1052 = vshrl.u32 %v1051, 7
      %v1053 = vsub.s32 1, %v1052
      %v1054 = vrot.slane %v969, %v1053
      %v1055 = vlaneseq
      %v1056 = vshrl.u32 %v1055, 7
      %v1057 = vsub.s32 2, %v1056
      %v1058 = vrot.slane %v969, %v1057
      %v1059 = vlaneseq
      %v1060 = vshrl.u32 %v1059, 7
      %v1061 = vsub.s32 3, %v1060
      %v1062 = vrot.slane %v969, %v1061
      %v1063 = vlaneseq
      %v1064 = vshrl.u32 %v1063, 7
      %v1065 = vsub.s32 4, %v1064
      %v1066 = vrot.slane %v969, %v1065
      %v1067 = vlaneseq
      %v1068 = vshrl.u32 %v1067, 7
      %v1069 = vsub.s32 5, %v1068
      %v1070 = vrot.slane %v969, %v1069
      %v1071 = vlaneseq
      %v1072 = vshrl.u32 %v1071, 7
      %v1073 = vsub.s32 6, %v1072
      %v1074 = vrot.slane %v969, %v1073
      %v1075 = vlaneseq
      %v1076 = vshrl.u32 %v1075, 7
      %v1077 = vsub.s32 7, %v1076
      %v1078 = vrot.slane %v969, %v1077
      %v1079 = vlaneseq
      %v1080 = vshrl.u32 %v1079, 7
      %v1081 = vsub.s32 0, %v1080
      %v1082 = vrot.slane %v970, %v1081
      %v1083 = vlaneseq
      %v1084 = vshrl.u32 %v1083, 7
      %v1085 = vsub.s32 1, %v1084
      %v1086 = vrot.slane %v970, %v1085
      %v1087 = vlaneseq
      %v1088 = vshrl.u32 %v1087, 7
      %v1089 = vsub.s32 2, %v1088
      %v1090 = vrot.slane %v970, %v1089
      %v1091 = vlaneseq
      %v1092 = vshrl.u32 %v1091, 7
      %v1093 = vsub.s32 3, %v1092
      %v1094 = vrot.slane %v970, %v1093
      %v1095 = vlaneseq
      %v1096 = vshrl.u32 %v1095, 7
      %v1097 = vsub.s32 4, %v1096
      %v1098 = vrot.slane %v970, %v1097
      %v1099 = vlaneseq
      %v1100 = vshrl.u32 %v1099, 7
      %v1101 = vsub.s32 5, %v1100
      %v1102 = vrot.slane %v970, %v1101
      %v1103 = vlaneseq
      %v1104 = vshrl.u32 %v1103, 7
      %v1105 = vsub.s32 6, %v1104
      %v1106 = vrot.slane %v970, %v1105
      %v1107 = vlaneseq
      %v1108 = vshrl.u32 %v1107, 7
      %v1109 = vsub.s32 7, %v1108
      %v1110 = vrot.slane %v970, %v1109
      %v1111 = vcombine.low %v986, %v990
      %v1112 = vcombine.low %v994, %v998
      %v1114 = vunpack.c.l.s4 1983009808
      %v1115 = vunpack.c.0.s8 %v1114
      %v1116 = vlaneseq
      %v1117 = vshrl.u32 %v1116, 7
      %v1118 = vsub.s32 %v1115, %v1117
      %v1119 = vrot.slane %v1111, %v1118
      %v1121 = vunpack.c.l.s4 1983009808
      %v1122 = vunpack.c.0.s8 %v1121
      %v1123 = vlaneseq
      %v1124 = vshrl.u32 %v1123, 7
      %v1125 = vsub.s32 %v1122, %v1124
      %v1126 = vrot.slane %v1112, %v1125
      %v1127 = vcombine.low %v1119, %v1126
      %v1128 = vcombine.low %v1002, %v1006
      %v1129 = vcombine.low %v1010, %v1014
      %v1131 = vunpack.c.l.s4 1983009808
      %v1132 = vunpack.c.0.s8 %v1131
      %v1133 = vlaneseq
      %v1134 = vshrl.u32 %v1133, 7
      %v1135 = vsub.s32 %v1132, %v1134
      %v1136 = vrot.slane %v1128, %v1135
      %v1138 = vunpack.c.l.s4 1983009808
      %v1139 = vunpack.c.0.s8 %v1138
      %v1140 = vlaneseq
      %v1141 = vshrl.u32 %v1140, 7
      %v1142 = vsub.s32 %v1139, %v1141
      %v1143 = vrot.slane %v1129, %v1142
      %v1144 = vcombine.low %v1136, %v1143
      %v1145 = vcombine.low %v1018, %v1022
      %v1146 = vcombine.low %v1026, %v1030
      %v1148 = vunpack.c.l.s4 1983009808
      %v1149 = vunpack.c.0.s8 %v1148
      %v1150 = vlaneseq
      %v1151 = vshrl.u32 %v1150, 7
      %v1152 = vsub.s32 %v1149, %v1151
      %v1153 = vrot.slane %v1145, %v1152
      %v1155 = vunpack.c.l.s4 1983009808
      %v1156 = vunpack.c.0.s8 %v1155
      %v1157 = vlaneseq
      %v1158 = vshrl.u32 %v1157, 7
      %v1159 = vsub.s32 %v1156, %v1158
      %v1160 = vrot.slane %v1146, %v1159
      %v1161 = vcombine.low %v1153, %v1160
      %v1162 = vcombine.low %v1034, %v1038
      %v1163 = vcombine.low %v1042, %v1046
      %v1165 = vunpack.c.l.s4 1983009808
      %v1166 = vunpack.c.0.s8 %v1165
      %v1167 = vlaneseq
      %v1168 = vshrl.u32 %v1167, 7
      %v1169 = vsub.s32 %v1166, %v1168
      %v1170 = vrot.slane %v1162, %v1169
      %v1172 = vunpack.c.l.s4 1983009808
      %v1173 = vunpack.c.0.s8 %v1172
      %v1174 = vlaneseq
      %v1175 = vshrl.u32 %v1174, 7
      %v1176 = vsub.s32 %v1173, %v1175
      %v1177 = vrot.slane %v1163, %v1176
      %v1178 = vcombine.low %v1170, %v1177
      %v1179 = vcombine.low %v1050, %v1054
      %v1180 = vcombine.low %v1058, %v1062
      %v1182 = vunpack.c.l.s4 1983009808
      %v1183 = vunpack.c.0.s8 %v1182
      %v1184 = vlaneseq
      %v1185 = vshrl.u32 %v1184, 7
      %v1186 = vsub.s32 %v1183, %v1185
      %v1187 = vrot.slane %v1179, %v1186
      %v1189 = vunpack.c.l.s4 1983009808
      %v1190 = vunpack.c.0.s8 %v1189
      %v1191 = vlaneseq
      %v1192 = vshrl.u32 %v1191, 7
      %v1193 = vsub.s32 %v1190, %v1192
      %v1194 = vrot.slane %v1180, %v1193
      %v1195 = vcombine.low %v1187, %v1194
      %v1196 = vcombine.low %v1066, %v1070
      %v1197 = vcombine.low %v1074, %v1078
      %v1199 = vunpack.c.l.s4 1983009808
      %v1200 = vunpack.c.0.s8 %v1199
      %v1201 = vlaneseq
      %v1202 = vshrl.u32 %v1201, 7
      %v1203 = vsub.s32 %v1200, %v1202
      %v1204 = vrot.slane %v1196, %v1203
      %v1206 = vunpack.c.l.s4 1983009808
      %v1207 = vunpack.c.0.s8 %v1206
      %v1208 = vlaneseq
      %v1209 = vshrl.u32 %v1208, 7
      %v1210 = vsub.s32 %v1207, %v1209
      %v1211 = vrot.slane %v1197, %v1210
      %v1212 = vcombine.low %v1204, %v1211
      %v1213 = vcombine.low %v1082, %v1086
      %v1214 = vcombine.low %v1090, %v1094
      %v1216 = vunpack.c.l.s4 1983009808
      %v1217 = vunpack.c.0.s8 %v1216
      %v1218 = vlaneseq
      %v1219 = vshrl.u32 %v1218, 7
      %v1220 = vsub.s32 %v1217, %v1219
      %v1221 = vrot.slane %v1213, %v1220
      %v1223 = vunpack.c.l.s4 1983009808
      %v1224 = vunpack.c.0.s8 %v1223
      %v1225 = vlaneseq
      %v1226 = vshrl.u32 %v1225, 7
      %v1227 = vsub.s32 %v1224, %v1226
      %v1228 = vrot.slane %v1214, %v1227
      %v1229 = vcombine.low %v1221, %v1228
      %v1230 = vcombine.low %v1098, %v1102
      %v1231 = vcombine.low %v1106, %v1110
      %v1233 = vunpack.c.l.s4 1983009808
      %v1234 = vunpack.c.0.s8 %v1233
      %v1235 = vlaneseq
      %v1236 = vshrl.u32 %v1235, 7
      %v1237 = vsub.s32 %v1234, %v1236
      %v1238 = vrot.slane %v1230, %v1237
      %v1240 = vunpack.c.l.s4 1983009808
      %v1241 = vunpack.c.0.s8 %v1240
      %v1242 = vlaneseq
      %v1243 = vshrl.u32 %v1242, 7
      %v1244 = vsub.s32 %v1241, %v1243
      %v1245 = vrot.slane %v1231, %v1244
      %v1246 = vcombine.low %v1238, %v1245
      %v1255 = vmul.f32 %v971, %v1127
      %v1256 = vmul.f32 %v972, %v1144
      %v1257 = vmul.f32 %v973, %v1161
      %v1258 = vmul.f32 %v974, %v1178
      %v1259 = vmul.f32 %v975, %v1195
      %v1260 = vmul.f32 %v976, %v1212
      %v1261 = vmul.f32 %v977, %v1229
      %v1262 = vmul.f32 %v978, %v1246
      %v1271 = vcombine.high %v1255, %v1255
      %v1273 = vunpack.c.l.s4 1983009808
      %v1274 = vunpack.c.0.s8 %v1273
      %v1275 = vlaneseq
      %v1276 = vshrl.u32 %v1275, 7
      %v1277 = vsub.s32 %v1274, %v1276
      %v1278 = vrot.slane %v1255, %v1277
      %v1280 = vunpack.c.l.s4 1983009808
      %v1281 = vunpack.c.0.s8 %v1280
      %v1282 = vlaneseq
      %v1283 = vshrl.u32 %v1282, 7
      %v1284 = vsub.s32 %v1281, %v1283
      %v1285 = vrot.slane %v1271, %v1284
      %v1286 = vcombine.high %v1278, %v1278
      %v1287 = vcombine.high %v1285, %v1285
      %v1288 = vcombine.high %v1256, %v1256
      %v1290 = vunpack.c.l.s4 1983009808
      %v1291 = vunpack.c.0.s8 %v1290
      %v1292 = vlaneseq
      %v1293 = vshrl.u32 %v1292, 7
      %v1294 = vsub.s32 %v1291, %v1293
      %v1295 = vrot.slane %v1256, %v1294
      %v1297 = vunpack.c.l.s4 1983009808
      %v1298 = vunpack.c.0.s8 %v1297
      %v1299 = vlaneseq
      %v1300 = vshrl.u32 %v1299, 7
      %v1301 = vsub.s32 %v1298, %v1300
      %v1302 = vrot.slane %v1288, %v1301
      %v1303 = vcombine.high %v1295, %v1295
      %v1304 = vcombine.high %v1302, %v1302
      %v1305 = vcombine.high %v1257, %v1257
      %v1307 = vunpack.c.l.s4 1983009808
      %v1308 = vunpack.c.0.s8 %v1307
      %v1309 = vlaneseq
      %v1310 = vshrl.u32 %v1309, 7
      %v1311 = vsub.s32 %v1308, %v1310
      %v1312 = vrot.slane %v1257, %v1311
      %v1314 = vunpack.c.l.s4 1983009808
      %v1315 = vunpack.c.0.s8 %v1314
      %v1316 = vlaneseq
      %v1317 = vshrl.u32 %v1316, 7
      %v1318 = vsub.s32 %v1315, %v1317
      %v1319 = vrot.slane %v1305, %v1318
      %v1320 = vcombine.high %v1312, %v1312
      %v1321 = vcombine.high %v1319, %v1319
      %v1322 = vcombine.high %v1258, %v1258
      %v1324 = vunpack.c.l.s4 1983009808
      %v1325 = vunpack.c.0.s8 %v1324
      %v1326 = vlaneseq
      %v1327 = vshrl.u32 %v1326, 7
      %v1328 = vsub.s32 %v1325, %v1327
      %v1329 = vrot.slane %v1258, %v1328
      %v1331 = vunpack.c.l.s4 1983009808
      %v1332 = vunpack.c.0.s8 %v1331
      %v1333 = vlaneseq
      %v1334 = vshrl.u32 %v1333, 7
      %v1335 = vsub.s32 %v1332, %v1334
      %v1336 = vrot.slane %v1322, %v1335
      %v1337 = vcombine.high %v1329, %v1329
      %v1338 = vcombine.high %v1336, %v1336
      %v1339 = vcombine.high %v1259, %v1259
      %v1341 = vunpack.c.l.s4 1983009808
      %v1342 = vunpack.c.0.s8 %v1341
      %v1343 = vlaneseq
      %v1344 = vshrl.u32 %v1343, 7
      %v1345 = vsub.s32 %v1342, %v1344
      %v1346 = vrot.slane %v1259, %v1345
      %v1348 = vunpack.c.l.s4 1983009808
      %v1349 = vunpack.c.0.s8 %v1348
      %v1350 = vlaneseq
      %v1351 = vshrl.u32 %v1350, 7
      %v1352 = vsub.s32 %v1349, %v1351
      %v1353 = vrot.slane %v1339, %v1352
      %v1354 = vcombine.high %v1346, %v1346
      %v1355 = vcombine.high %v1353, %v1353
      %v1356 = vcombine.high %v1260, %v1260
      %v1358 = vunpack.c.l.s4 1983009808
      %v1359 = vunpack.c.0.s8 %v1358
      %v1360 = vlaneseq
      %v1361 = vshrl.u32 %v1360, 7
      %v1362 = vsub.s32 %v1359, %v1361
      %v1363 = vrot.slane %v1260, %v1362
      %v1365 = vunpack.c.l.s4 1983009808
      %v1366 = vunpack.c.0.s8 %v1365
      %v1367 = vlaneseq
      %v1368 = vshrl.u32 %v1367, 7
      %v1369 = vsub.s32 %v1366, %v1368
      %v1370 = vrot.slane %v1356, %v1369
      %v1371 = vcombine.high %v1363, %v1363
      %v1372 = vcombine.high %v1370, %v1370
      %v1373 = vcombine.high %v1261, %v1261
      %v1375 = vunpack.c.l.s4 1983009808
      %v1376 = vunpack.c.0.s8 %v1375
      %v1377 = vlaneseq
      %v1378 = vshrl.u32 %v1377, 7
      %v1379 = vsub.s32 %v1376, %v1378
      %v1380 = vrot.slane %v1261, %v1379
      %v1382 = vunpack.c.l.s4 1983009808
      %v1383 = vunpack.c.0.s8 %v1382
      %v1384 = vlaneseq
      %v1385 = vshrl.u32 %v1384, 7
      %v1386 = vsub.s32 %v1383, %v1385
      %v1387 = vrot.slane %v1373, %v1386
      %v1388 = vcombine.high %v1380, %v1380
      %v1389 = vcombine.high %v1387, %v1387
      %v1390 = vcombine.high %v1262, %v1262
      %v1392 = vunpack.c.l.s4 1983009808
      %v1393 = vunpack.c.0.s8 %v1392
      %v1394 = vlaneseq
      %v1395 = vshrl.u32 %v1394, 7
      %v1396 = vsub.s32 %v1393, %v1395
      %v1397 = vrot.slane %v1262, %v1396
      %v1399 = vunpack.c.l.s4 1983009808
      %v1400 = vunpack.c.0.s8 %v1399
      %v1401 = vlaneseq
      %v1402 = vshrl.u32 %v1401, 7
      %v1403 = vsub.s32 %v1400, %v1402
      %v1404 = vrot.slane %v1390, %v1403
      %v1405 = vcombine.high %v1397, %v1397
      %v1406 = vcombine.high %v1404, %v1404
      %vm1439 = vcmask 1041408
      %v1440 = vsel %vm1439, %v1278, 0.0
      %v1441 = vsel %vm1439, %v1286, 0.0
      %v1442 = vadd.f32 %v1440, %v1441
      %v1443 = vsel %vm1439, %v1285, 0.0
      %v1444 = vadd.f32 %v1442, %v1443
      %v1445 = vsel %vm1439, %v1287, 0.0
      %v1446 = vadd.f32 %v1444, %v1445
      %v1447 = vsel %vm1439, %v1295, 0.0
      %v1448 = vadd.f32 %v1446, %v1447
      %v1449 = vsel %vm1439, %v1303, 0.0
      %v1450 = vadd.f32 %v1448, %v1449
      %v1451 = vsel %vm1439, %v1302, 0.0
      %v1452 = vadd.f32 %v1450, %v1451
      %v1453 = vsel %vm1439, %v1304, 0.0
      %v1454 = vadd.f32 %v1452, %v1453
      %v1455 = vsel %vm1439, %v1312, 0.0
      %v1456 = vadd.f32 %v1454, %v1455
      %v1457 = vsel %vm1439, %v1320, 0.0
      %v1458 = vadd.f32 %v1456, %v1457
      %v1459 = vsel %vm1439, %v1319, 0.0
      %v1460 = vadd.f32 %v1458, %v1459
      %v1461 = vsel %vm1439, %v1321, 0.0
      %v1462 = vadd.f32 %v1460, %v1461
      %v1463 = vsel %vm1439, %v1329, 0.0
      %v1464 = vadd.f32 %v1462, %v1463
      %v1465 = vsel %vm1439, %v1337, 0.0
      %v1466 = vadd.f32 %v1464, %v1465
      %v1467 = vsel %vm1439, %v1336, 0.0
      %v1468 = vadd.f32 %v1466, %v1467
      %v1469 = vsel %vm1439, %v1338, 0.0
      %v1470 = vadd.f32 %v1468, %v1469
      %v1471 = vsel %vm1439, %v1346, 0.0
      %v1472 = vadd.f32 %v1470, %v1471
      %v1473 = vsel %vm1439, %v1354, 0.0
      %v1474 = vadd.f32 %v1472, %v1473
      %v1475 = vsel %vm1439, %v1353, 0.0
      %v1476 = vadd.f32 %v1474, %v1475
      %v1477 = vsel %vm1439, %v1355, 0.0
      %v1478 = vadd.f32 %v1476, %v1477
      %v1479 = vsel %vm1439, %v1363, 0.0
      %v1480 = vadd.f32 %v1478, %v1479
      %v1481 = vsel %vm1439, %v1371, 0.0
      %v1482 = vadd.f32 %v1480, %v1481
      %v1483 = vsel %vm1439, %v1370, 0.0
      %v1484 = vadd.f32 %v1482, %v1483
      %v1485 = vsel %vm1439, %v1372, 0.0
      %v1486 = vadd.f32 %v1484, %v1485
      %v1487 = vsel %vm1439, %v1380, 0.0
      %v1488 = vadd.f32 %v1486, %v1487
      %v1489 = vsel %vm1439, %v1388, 0.0
      %v1490 = vadd.f32 %v1488, %v1489
      %v1491 = vsel %vm1439, %v1387, 0.0
      %v1492 = vadd.f32 %v1490, %v1491
      %v1493 = vsel %vm1439, %v1389, 0.0
      %v1494 = vadd.f32 %v1492, %v1493
      %v1495 = vsel %vm1439, %v1397, 0.0
      %v1496 = vadd.f32 %v1494, %v1495
      %v1497 = vsel %vm1439, %v1405, 0.0
      %v1498 = vadd.f32 %v1496, %v1497
      %v1499 = vsel %vm1439, %v1404, 0.0
      %v1500 = vadd.f32 %v1498, %v1499
      %v1501 = vsel %vm1439, %v1406, 0.0
      %v1502 = vadd.f32 %v1500, %v1501
      %1503 = vadd.xlane.f32.xlu0 %v1502
      %v1504 = vpop.xlane.xlu0 %1503
      %vm1505 = vcmask 1024
      %1506 = vst.msk [vmem:[%s2] sm:$0x3] %vm1505, %v1504
    $region25: #{tpu_custom_call.1} parent=1 // pred_fallthru
      _
    // Predicated region
    $region26: #{tpu_custom_call.1} parent=1 // pred_check
      _
    $region27: #{tpu_custom_call.1} parent=1 // pred_check_branch
      %1508 = sbr.rel (0) target = $region29
    $region28: #{tpu_custom_call.1} parent=1 // pred_region
      _
    $region29: #{tpu_custom_call.1} parent=1 // pred_fallthru
      _
    // Predicated region
    $region30: #{tpu_custom_call.1} parent=1 // pred_check
      _
    $region31: #{tpu_custom_call.1} parent=1 // pred_check_branch
      %1510 = sbr.rel (0) target = $region33
    $region32: #{tpu_custom_call.1} parent=1 // pred_region
      _
    $region33: #{tpu_custom_call.1} parent=1 // pred_fallthru
      _
    %1511 = vsyncpa [#allocation4], 1
    %1512 = vsyncpa [#allocation6], 1

</llo_original>
